<compile_context>
chip_gen: v6e
topology: v6e:2x2x1
jax: 0.10.0
libtpu: 0.0.40
codegen_flags: <defaults>
</compile_context>

<pallas_src>
import math
import functools

import numpy as np
import jax
import jax.numpy as jnp
from jax.experimental import pallas as pl
from jax.experimental.pallas import tpu as pltpu

BITS = 4                      # quantize_bits
SIG_SCALE = 5.0               # sig_scale
KSIZE = 5                     # Gaussian kernel_size
PAD = (KSIZE - 1) // 2        # spatial 'same' padding
N_LEVELS = 2 ** BITS - 1
QMAX = 2.0 ** BITS - 1.0
LPAD = 128                    # lane-aligned zero-pad width inside the scratch
MMLANES = 128                 # lane width of per-block min/max output (layout-safe)
N_ACC = 3                     # independent partial accumulators in level loop


def _bf16_eup_supported():
    """bf16 tanh on the EUP is a win on v6e/v7x; v5e and older lack a bf16 EUP."""
    try:
        kind = jax.devices()[0].device_kind.lower()
    except Exception:
        return False
    return not any(t in kind for t in ("v2", "v3", "v4", "v5"))


USE_BF16_TANH = _bf16_eup_supported()


def _gaussian_taps_1d(ksize=KSIZE, sigma=3.0):
    """Normalized 1-D Gaussian taps (Python floats, baked into the kernel).

    The GaussianSmoothing 3-D kernel is separable: the temporal factor (size 1)
    cancels under normalization and the 2-D kernel equals outer(g, g) with g
    normalized to sum 1, so two 1-D passes reproduce it exactly.
    """
    coords = np.arange(ksize, dtype=np.float64)
    mean = (ksize - 1) / 2.0
    g = (1.0 / (sigma * math.sqrt(2.0 * math.pi))) * np.exp(
        -(((coords - mean) / sigma) ** 2) / 2.0)
    g = g / g.sum()
    return tuple(float(v) for v in g)


def _blur_diff_kernel(x_ref, d_ref, mm_ref, xpad_ref, *, H, W, taps):
    """Separable 5x5 Gaussian blur + temporal frame diff for one (n, c) slab.

    x_ref    : (T, H*W)          f32 VMEM  flattened frames, lane-dense
    d_ref    : (T-1, H*W)        f32 VMEM  blurred frame difference (output)
    mm_ref   : (2, MMLANES)      f32 VMEM  per-block [min; max], lane-broadcast
    xpad_ref : (T, 2*LPAD + H*W) f32 VMEM  scratch shared by both blur passes
    """
    HW = H * W
    T = x_ref.shape[0]

    # Zero only the pad lanes (not the full buffer); interior is overwritten
    # below.  Re-zeroed every grid step so correctness is preserved when the
    # "parallel" grid is split across TensorCores (v7x).
    xpad_ref[:, :LPAD] = jnp.zeros((T, LPAD), jnp.float32)
    xpad_ref[:, LPAD + HW:] = jnp.zeros((T, LPAD), jnp.float32)
    xpad_ref[:, LPAD:LPAD + HW] = x_ref[...]

    # Vertical 5-tap pass: in the flat H*W layout a row shift of (di - PAD) is
    # a lane shift of (di - PAD) * W; zero padding supplies the boundary zeros.
    # Tap windows are read straight from the ref (static offsets), so only one
    # HW-wide window is live per tap -> no vreg spills.
    v = taps[0] * xpad_ref[:, LPAD - PAD * W:LPAD - PAD * W + HW]
    for di in range(1, KSIZE):
        off = LPAD + (di - PAD) * W
        v = v + taps[di] * xpad_ref[:, off:off + HW]

    # Horizontal 5-tap pass out of the SAME scratch: the padded x is dead, the
    # pad lanes are still zero, only the interior is rewritten.
    xpad_ref[:, LPAD:LPAD + HW] = v

    # Per-tap masked weight rows of shape (1, HW): tap weight where the source
    # column stays inside the row, 0 across the row seam.  Tiny (1, HW) iota +
    # 4 selects instead of full-tensor compares/selects per tap.
    iota = jax.lax.broadcasted_iota(jnp.int32, (1, HW), 1)
    col = (iota & (W - 1)) if (W & (W - 1)) == 0 else (iota % W)

    b = taps[PAD] * v                         # center tap: reuse in-register v
    for dj in range(KSIZE):
        if dj == PAD:
            continue
        off = LPAD + (dj - PAD)
        if dj < PAD:
            wrow = jnp.where(col >= (PAD - dj), taps[dj], 0.0)
        else:
            wrow = jnp.where(col <= (W - 1 - (dj - PAD)), taps[dj], 0.0)
        b = b + xpad_ref[:, off:off + HW] * wrow   # (T,HW) * (1,HW) broadcast

    # Temporal frame difference x[t] - x[t-1], t >= 1, plus per-block extrema.
    d = b[1:, :] - b[:-1, :]
    d_ref[...] = d
    mm_ref[0:1, :] = jnp.broadcast_to(jnp.min(d), (1, MMLANES))
    mm_ref[1:2, :] = jnp.broadcast_to(jnp.max(d), (1, MMLANES))


def _quant_kernel(mm_ref, bias_ref, d_ref, y_ref, *,
                  sig_scale, qmax, n_levels, use_bf16):
    """Soft quantization of one (n, c) slab using the GLOBAL min/max.

    mm_ref   : (2,)        f32 SMEM (scalar prefetch) [global min, global max]
    bias_ref : (n_levels,) f32 SMEM (scalar prefetch) clamped + sorted bias
    d_ref    : (T-1, H*W)  f32 VMEM
    y_ref    : (T-1, H*W)  f32 VMEM
    """
    min_v = mm_ref[0]
    max_v = mm_ref[1]
    scale = jnp.maximum((max_v - min_v) / qmax, 0.0001)

    xs = (d_ref[...] - min_v) * (qmax / (max_v - min_v + 0.0001))

    # sigmoid(s) = 0.5 * tanh(s/2) + 0.5  -> one EUP push per level.
    half = 0.5 * sig_scale
    xs_h = half * xs

    # EUP is the binding unit (n_levels tanh/element vs ~10 blur MACs):
    #  * on bf16-EUP chips the tanh argument is truncated to bf16 (packed EUP
    #    pushes); the argument is formed in f32 so near-zero inputs stay exact,
    #  * N_ACC independent partial accumulators (kept in f32 -- the extra VALU
    #    widens/adds ride in the EUP's shadow) keep the EUP result FIFO full.
    accs = [None] * N_ACC
    for i in range(n_levels):                          # statically unrolled
        z = xs_h - half * bias_ref[i]
        if use_bf16:
            t = jnp.tanh(z.astype(jnp.bfloat16)).astype(jnp.float32)
        else:
            t = jnp.tanh(z)
        j = i % N_ACC
        accs[j] = t if accs[j] is None else accs[j] + t
    acc = functools.reduce(lambda a, b: a + b, [a for a in accs if a is not None])

    y = 0.5 * acc + 0.5 * n_levels
    y_ref[...] = y * scale + min_v


@jax.jit
def degrad_forward(x, bias):
    """x: (N, 3, T, H, W) float32.  Returns (y, bias) like the torch module."""
    N, C, T, H, W = x.shape
    NC, HW = N * C, H * W
    taps = _gaussian_taps_1d()

    # Metadata-only reshape: (N, C, T, H, W) -> (N*C, T, H*W), lane-dense.
    x_flat = x.reshape(NC, T, HW)

    # Parameter in-place ops from the torch forward (clamp + sort of bias.data).
    bias_p = jnp.sort(jnp.clip(bias, 0.0, QMAX))

    # ---- phase 1: blur + frame diff, per-block min/max (grid over N*C) ------
    d, mm = pl.pallas_call(
        functools.partial(_blur_diff_kernel, H=H, W=W, taps=taps),
        out_shape=(jax.ShapeDtypeStruct((NC, T - 1, HW), jnp.float32),
                   jax.ShapeDtypeStruct((NC, 2, MMLANES), jnp.float32)),
        grid=(NC,),
        in_specs=[pl.BlockSpec((None, T, HW), lambda i: (i, 0, 0))],
        out_specs=(pl.BlockSpec((None, T - 1, HW), lambda i: (i, 0, 0)),
                   pl.BlockSpec((None, 2, MMLANES), lambda i: (i, 0, 0))),
        scratch_shapes=[pltpu.VMEM((T, 2 * LPAD + HW), jnp.float32)],
        compiler_params=pltpu.CompilerParams(
            dimension_semantics=("parallel",)),
    )(x_flat)

    # Tiny global reduce over the N*C per-block extrema (NC scalars in XLA).
    minmax = jnp.stack([jnp.min(mm[:, 0, 0]), jnp.max(mm[:, 1, 0])])

    # ---- phase 2: global-range soft quantization (grid over N*C) ------------
    y = pl.pallas_call(
        functools.partial(_quant_kernel, sig_scale=SIG_SCALE, qmax=QMAX,
                          n_levels=N_LEVELS, use_bf16=USE_BF16_TANH),
        out_shape=jax.ShapeDtypeStruct((NC, T - 1, HW), jnp.float32),
        grid_spec=pltpu.PrefetchScalarGridSpec(
            num_scalar_prefetch=2,                     # minmax, bias -> SMEM
            grid=(NC,),
            in_specs=[pl.BlockSpec((None, T - 1, HW),
                                   lambda i, *_: (i, 0, 0))],
            out_specs=pl.BlockSpec((None, T - 1, HW),
                                   lambda i, *_: (i, 0, 0))),
        compiler_params=pltpu.CompilerParams(
            dimension_semantics=("parallel",)),
    )(minmax, bias_p, d)

    y = y.reshape(N, C, T - 1, H, W)
    # TODO(synk): module attributes blur_output / diff_output are stored but
    # never returned by the torch forward; they are not materialized here.
    return y, bias_p


def _reference(x, bias):
    """Pure-JAX reference of the torch forward for verification."""
    N, C, T, H, W = x.shape
    taps = np.asarray(_gaussian_taps_1d(), dtype=np.float32)
    k2d = jnp.asarray(np.outer(taps, taps).astype(np.float32))
    x4 = x.reshape(N * C * T, 1, H, W)
    w4 = k2d[None, None]
    blur = jax.lax.conv_general_dilated(
        x4, w4, (1, 1), ((PAD, PAD), (PAD, PAD)))
    blur = blur.reshape(N, C, T, H, W)
    d = blur[:, :, 1:] - blur[:, :, :-1]
    min_v = jnp.min(d)
    max_v = jnp.max(d)
    scale = jnp.maximum((max_v - min_v) / QMAX, 0.0001)
    xs = (d - min_v) / (max_v - min_v + 0.0001) * QMAX
    bias_p = jnp.sort(jnp.clip(bias, 0.0, QMAX))
    y = jnp.zeros_like(xs)
    for i in range(N_LEVELS):
        y = y + 1.0 / (1.0 + jnp.exp(-SIG_SCALE * (xs - bias_p[i])))
    return y * scale + min_v, bias_p


if __name__ == "__main__":
    key = jax.random.PRNGKey(0)
    N, C, T, H, W = 2, 3, 8, 16, 16        # C must be 3 (3->3 grouped conv)
    x = jax.random.normal(key, (N, C, T, H, W), dtype=jnp.float32)

    # Deterministic bias parameter (shape per the module __init__).
    bias = jnp.asarray(
        np.linspace(0, 2 ** BITS - 1, 2 ** BITS, dtype=np.float32)[:-1] + 0.5)

    y, bias_out = degrad_forward(x, bias)
    jax.block_until_ready((y, bias_out))

    assert y.shape == (N, C, T - 1, H, W)
    assert bias_out.shape == (N_LEVELS,)

    y_ref, bias_ref_v = _reference(x, bias)
    if USE_BF16_TANH:
        rtol, atol = 2e-2, 5e-2            # bf16 tanh path (v6e / v7x)
    else:
        rtol, atol = 1e-3, 1e-3            # f32 path (v5e and older)
    np.testing.assert_allclose(np.asarray(y), np.asarray(y_ref),
                               rtol=rtol, atol=atol)
    np.testing.assert_allclose(np.asarray(bias_out), np.asarray(bias_ref_v),
                               rtol=1e-6, atol=1e-6)
    print("KERNEL_OK")
</pallas_src>

<mosaic_0001>
module attributes {stable_mosaic.version = 11 : i64} {
  func.func @_blur_diff_kernel(%arg0: i32, %arg1: memref<1x8x256xf32, #tpu.memory_space<vmem>>, %arg2: memref<1x7x256xf32, #tpu.memory_space<vmem>>, %arg3: memref<1x2x128xf32, #tpu.memory_space<vmem>>, %arg4: memref<8x512xf32, #tpu.memory_space<vmem>>) attributes {dimension_semantics = [#tpu.dimension_semantics<parallel>], iteration_bounds = array<i64: 6>, scalar_prefetch = 0 : i64, scratch_operands = 1 : i64, tpu.core_type = #tpu.core_type<tc>, window_params = [{transform_indices = @transform_0, window_bounds = array<i64: 1, 8, 256>}, {transform_indices = @transform_1, window_bounds = array<i64: 1, 7, 256>}, {transform_indices = @transform_2, window_bounds = array<i64: 1, 2, 128>}]} {
    %cst = arith.constant 0.000000e+00 : f32
    %0 = vector.broadcast %cst : f32 to vector<8x128xf32>
    %c0 = arith.constant 0 : index
    %c0_0 = arith.constant 0 : index
    %1 = vector.load %arg4[%c0, %c0_0] : memref<8x512xf32, #tpu.memory_space<vmem>>, vector<8x128xf32>
    tpu.vector_store %arg4[%c0, %c0_0], %0 {strides = array<i32>} : memref<8x512xf32, #tpu.memory_space<vmem>>, vector<8x128xf32>,
    %cst_1 = arith.constant 0.000000e+00 : f32
    %2 = vector.broadcast %cst_1 : f32 to vector<8x128xf32>
    %c0_2 = arith.constant 0 : index
    %c384 = arith.constant 384 : index
    %3 = vector.load %arg4[%c0_2, %c384] : memref<8x512xf32, #tpu.memory_space<vmem>>, vector<8x128xf32>
    tpu.vector_store %arg4[%c0_2, %c384], %2 {strides = array<i32>} : memref<8x512xf32, #tpu.memory_space<vmem>>, vector<8x128xf32>,
    %c0_3 = arith.constant 0 : index
    %c0_4 = arith.constant 0 : index
    %c0_5 = arith.constant 0 : index
    %4 = vector.load %arg1[%c0_3, %c0_4, %c0_5] : memref<1x8x256xf32, #tpu.memory_space<vmem>>, vector<1x8x256xf32>
    %5 = vector.shape_cast %4 : vector<1x8x256xf32> to vector<8x256xf32>
    %c0_6 = arith.constant 0 : index
    %c128 = arith.constant 128 : index
    %6 = vector.load %arg4[%c0_6, %c128] : memref<8x512xf32, #tpu.memory_space<vmem>>, vector<8x256xf32>
    tpu.vector_store %arg4[%c0_6, %c128], %5 {strides = array<i32>} : memref<8x512xf32, #tpu.memory_space<vmem>>, vector<8x256xf32>,
    %c0_7 = arith.constant 0 : index
    %c96 = arith.constant 96 : index
    %7 = vector.load %arg4[%c0_7, %c96] : memref<8x512xf32, #tpu.memory_space<vmem>>, vector<8x256xf32>
    %cst_8 = arith.constant 0.178203255 : f32
    %8 = vector.broadcast %cst_8 : f32 to vector<8x256xf32>
    %9 = arith.mulf %8, %7 : vector<8x256xf32>
    %c0_9 = arith.constant 0 : index
    %c112 = arith.constant 112 : index
    %10 = vector.load %arg4[%c0_9, %c112] : memref<8x512xf32, #tpu.memory_space<vmem>>, vector<8x256xf32>
    %cst_10 = arith.constant 0.210522279 : f32
    %11 = vector.broadcast %cst_10 : f32 to vector<8x256xf32>
    %12 = arith.mulf %11, %10 : vector<8x256xf32>
    %13 = arith.addf %9, %12 : vector<8x256xf32>
    %c0_11 = arith.constant 0 : index
    %c128_12 = arith.constant 128 : index
    %14 = vector.load %arg4[%c0_11, %c128_12] : memref<8x512xf32, #tpu.memory_space<vmem>>, vector<8x256xf32>
    %cst_13 = arith.constant 0.222548932 : f32
    %15 = vector.broadcast %cst_13 : f32 to vector<8x256xf32>
    %16 = arith.mulf %15, %14 : vector<8x256xf32>
    %17 = arith.addf %13, %16 : vector<8x256xf32>
    %c0_14 = arith.constant 0 : index
    %c144 = arith.constant 144 : index
    %18 = vector.load %arg4[%c0_14, %c144] : memref<8x512xf32, #tpu.memory_space<vmem>>, vector<8x256xf32>
    %cst_15 = arith.constant 0.210522279 : f32
    %19 = vector.broadcast %cst_15 : f32 to vector<8x256xf32>
    %20 = arith.mulf %19, %18 : vector<8x256xf32>
    %21 = arith.addf %17, %20 : vector<8x256xf32>
    %c0_16 = arith.constant 0 : index
    %c160 = arith.constant 160 : index
    %22 = vector.load %arg4[%c0_16, %c160] : memref<8x512xf32, #tpu.memory_space<vmem>>, vector<8x256xf32>
    %cst_17 = arith.constant 0.178203255 : f32
    %23 = vector.broadcast %cst_17 : f32 to vector<8x256xf32>
    %24 = arith.mulf %23, %22 : vector<8x256xf32>
    %25 = arith.addf %21, %24 : vector<8x256xf32>
    %c0_18 = arith.constant 0 : index
    %c128_19 = arith.constant 128 : index
    %26 = vector.load %arg4[%c0_18, %c128_19] : memref<8x512xf32, #tpu.memory_space<vmem>>, vector<8x256xf32>
    tpu.vector_store %arg4[%c0_18, %c128_19], %25 {strides = array<i32>} : memref<8x512xf32, #tpu.memory_space<vmem>>, vector<8x256xf32>,
    %27 = tpu.iota {dimensions = array<i32: 1>} : vector<1x256xi32>
    %c15_i32 = arith.constant 15 : i32
    %28 = vector.broadcast %c15_i32 : i32 to vector<1x256xi32>
    %29 = arith.andi %27, %28 : vector<1x256xi32>
    %cst_20 = arith.constant 0.222548932 : f32
    %30 = vector.broadcast %cst_20 : f32 to vector<8x256xf32>
    %31 = arith.mulf %30, %25 : vector<8x256xf32>
    %c2_i32 = arith.constant 2 : i32
    %32 = vector.broadcast %c2_i32 : i32 to vector<1x256xi32>
    %33 = arith.cmpi sge, %29, %32 : vector<1x256xi32>
    %cst_21 = arith.constant 0.178203255 : f32
    %cst_22 = arith.constant 0.000000e+00 : f32
    %34 = vector.broadcast %cst_21 : f32 to vector<1x256xf32>
    %35 = vector.broadcast %cst_22 : f32 to vector<1x256xf32>
    %36 = arith.select %33, %34, %35 : vector<1x256xi1>, vector<1x256xf32>
    %c0_23 = arith.constant 0 : index
    %c126 = arith.constant 126 : index
    %37 = vector.load %arg4[%c0_23, %c126] : memref<8x512xf32, #tpu.memory_space<vmem>>, vector<8x256xf32>
    %38 = vector.broadcast %36 : vector<1x256xf32> to vector<8x256xf32>
    %39 = arith.mulf %37, %38 : vector<8x256xf32>
    %40 = arith.addf %31, %39 : vector<8x256xf32>
    %c1_i32 = arith.constant 1 : i32
    %41 = vector.broadcast %c1_i32 : i32 to vector<1x256xi32>
    %42 = arith.cmpi sge, %29, %41 : vector<1x256xi32>
    %cst_24 = arith.constant 0.210522279 : f32
    %cst_25 = arith.constant 0.000000e+00 : f32
    %43 = vector.broadcast %cst_24 : f32 to vector<1x256xf32>
    %44 = vector.broadcast %cst_25 : f32 to vector<1x256xf32>
    %45 = arith.select %42, %43, %44 : vector<1x256xi1>, vector<1x256xf32>
    %c0_26 = arith.constant 0 : index
    %c127 = arith.constant 127 : index
    %46 = vector.load %arg4[%c0_26, %c127] : memref<8x512xf32, #tpu.memory_space<vmem>>, vector<8x256xf32>
    %47 = vector.broadcast %45 : vector<1x256xf32> to vector<8x256xf32>
    %48 = arith.mulf %46, %47 : vector<8x256xf32>
    %49 = arith.addf %40, %48 : vector<8x256xf32>
    %c14_i32 = arith.constant 14 : i32
    %50 = vector.broadcast %c14_i32 : i32 to vector<1x256xi32>
    %51 = arith.cmpi sle, %29, %50 : vector<1x256xi32>
    %cst_27 = arith.constant 0.210522279 : f32
    %cst_28 = arith.constant 0.000000e+00 : f32
    %52 = vector.broadcast %cst_27 : f32 to vector<1x256xf32>
    %53 = vector.broadcast %cst_28 : f32 to vector<1x256xf32>
    %54 = arith.select %51, %52, %53 : vector<1x256xi1>, vector<1x256xf32>
    %c0_29 = arith.constant 0 : index
    %c129 = arith.constant 129 : index
    %55 = vector.load %arg4[%c0_29, %c129] : memref<8x512xf32, #tpu.memory_space<vmem>>, vector<8x256xf32>
    %56 = vector.broadcast %54 : vector<1x256xf32> to vector<8x256xf32>
    %57 = arith.mulf %55, %56 : vector<8x256xf32>
    %58 = arith.addf %49, %57 : vector<8x256xf32>
    %c13_i32 = arith.constant 13 : i32
    %59 = vector.broadcast %c13_i32 : i32 to vector<1x256xi32>
    %60 = arith.cmpi sle, %29, %59 : vector<1x256xi32>
    %cst_30 = arith.constant 0.178203255 : f32
    %cst_31 = arith.constant 0.000000e+00 : f32
    %61 = vector.broadcast %cst_30 : f32 to vector<1x256xf32>
    %62 = vector.broadcast %cst_31 : f32 to vector<1x256xf32>
    %63 = arith.select %60, %61, %62 : vector<1x256xi1>, vector<1x256xf32>
    %c0_32 = arith.constant 0 : index
    %c130 = arith.constant 130 : index
    %64 = vector.load %arg4[%c0_32, %c130] : memref<8x512xf32, #tpu.memory_space<vmem>>, vector<8x256xf32>
    %65 = vector.broadcast %63 : vector<1x256xf32> to vector<8x256xf32>
    %66 = arith.mulf %64, %65 : vector<8x256xf32>
    %67 = arith.addf %58, %66 : vector<8x256xf32>
    %68 = vector.extract_strided_slice %67 {offsets = [1, 0], sizes = [7, 256], strides = [1, 1]} : vector<8x256xf32> to vector<7x256xf32>
    %69 = vector.extract_strided_slice %67 {offsets = [0, 0], sizes = [7, 256], strides = [1, 1]} : vector<8x256xf32> to vector<7x256xf32>
    %70 = arith.subf %68, %69 : vector<7x256xf32>
    %c0_33 = arith.constant 0 : index
    %c0_34 = arith.constant 0 : index
    %c0_35 = arith.constant 0 : index
    %71 = vector.load %arg2[%c0_33, %c0_34, %c0_35] : memref<1x7x256xf32, #tpu.memory_space<vmem>>, vector<1x7x256xf32>
    %72 = vector.shape_cast %71 : vector<1x7x256xf32> to vector<7x256xf32>
    %73 = vector.shape_cast %70 : vector<7x256xf32> to vector<1x7x256xf32>
    tpu.vector_store %arg2[%c0_33, %c0_34, %c0_35], %73 {strides = array<i32>} : memref<1x7x256xf32, #tpu.memory_space<vmem>>, vector<1x7x256xf32>,
    %74 = vector.shape_cast %70 : vector<7x256xf32> to vector<1x7x256xf32>
    %cst_36 = arith.constant dense<0x7F800000> : vector<1xf32>
    %75 = vector.multi_reduction <minimumf>, %74, %cst_36 [1, 2] : vector<1x7x256xf32> to vector<1xf32>
    %76 = vector.shape_cast %75 : vector<1xf32> to vector<1x1x1xf32>
    %77 = vector.extract %76[0, 0, 0] : f32 from vector<1x1x1xf32>
    %78 = vector.broadcast %77 : f32 to vector<1x128xf32>
    %c0_37 = arith.constant 0 : index
    %c0_38 = arith.constant 0 : index
    %c0_39 = arith.constant 0 : index
    %79 = vector.load %arg3[%c0_37, %c0_38, %c0_39] : memref<1x2x128xf32, #tpu.memory_space<vmem>>, vector<1x1x128xf32>
    %80 = vector.shape_cast %79 : vector<1x1x128xf32> to vector<1x128xf32>
    %81 = vector.shape_cast %78 : vector<1x128xf32> to vector<1x1x128xf32>
    tpu.vector_store %arg3[%c0_37, %c0_38, %c0_39], %81 {strides = array<i32>} : memref<1x2x128xf32, #tpu.memory_space<vmem>>, vector<1x1x128xf32>,
    %82 = vector.shape_cast %70 : vector<7x256xf32> to vector<1x7x256xf32>
    %cst_40 = arith.constant dense<0xFF800000> : vector<1xf32>
    %83 = vector.multi_reduction <maximumf>, %82, %cst_40 [1, 2] : vector<1x7x256xf32> to vector<1xf32>
    %84 = vector.shape_cast %83 : vector<1xf32> to vector<1x1x1xf32>
    %85 = vector.extract %84[0, 0, 0] : f32 from vector<1x1x1xf32>
    %86 = vector.broadcast %85 : f32 to vector<1x128xf32>
    %c0_41 = arith.constant 0 : index
    %c1 = arith.constant 1 : index
    %c0_42 = arith.constant 0 : index
    %87 = vector.load %arg3[%c0_41, %c1, %c0_42] : memref<1x2x128xf32, #tpu.memory_space<vmem>>, vector<1x1x128xf32>
    %88 = vector.shape_cast %87 : vector<1x1x128xf32> to vector<1x128xf32>
    %89 = vector.shape_cast %86 : vector<1x128xf32> to vector<1x1x128xf32>
    tpu.vector_store %arg3[%c0_41, %c1, %c0_42], %89 {strides = array<i32>} : memref<1x2x128xf32, #tpu.memory_space<vmem>>, vector<1x1x128xf32>,
    return
  }
  func.func @transform_0(%arg0: i32) -> (i32, i32, i32) {
    %c0_i32 = arith.constant 0 : i32
    %c0_i32_0 = arith.constant 0 : i32
    %c0_i32_1 = arith.constant 0 : i32
    return %arg0, %c0_i32, %c0_i32_0 : i32, i32, i32
  }
  func.func @transform_1(%arg0: i32) -> (i32, i32, i32) {
    %c0_i32 = arith.constant 0 : i32
    %c0_i32_0 = arith.constant 0 : i32
    %c0_i32_1 = arith.constant 0 : i32
    return %arg0, %c0_i32, %c0_i32_0 : i32, i32, i32
  }
  func.func @transform_2(%arg0: i32) -> (i32, i32, i32) {
    %c0_i32 = arith.constant 0 : i32
    %c0_i32_0 = arith.constant 0 : i32
    %c0_i32_1 = arith.constant 0 : i32
    return %arg0, %c0_i32, %c0_i32_0 : i32, i32, i32
  }
}

module attributes {stable_mosaic.version = 11 : i64} {
  func.func @_quant_kernel(%arg0: i32, %arg1: memref<2xf32, #tpu.memory_space<smem>>, %arg2: memref<15xf32, #tpu.memory_space<smem>>, %arg3: memref<1x7x256xf32, #tpu.memory_space<vmem>>, %arg4: memref<1x7x256xf32, #tpu.memory_space<vmem>>) attributes {dimension_semantics = [#tpu.dimension_semantics<parallel>], iteration_bounds = array<i64: 6>, scalar_prefetch = 2 : i64, scratch_operands = 0 : i64, tpu.core_type = #tpu.core_type<tc>, window_params = [{transform_indices = @transform_0, window_bounds = array<i64: 1, 7, 256>}, {transform_indices = @transform_1, window_bounds = array<i64: 1, 7, 256>}]} {
    %c0 = arith.constant 0 : index
    %0 = memref.load %arg1[%c0] : memref<2xf32, #tpu.memory_space<smem>>
    %c1 = arith.constant 1 : index
    %1 = memref.load %arg1[%c1] : memref<2xf32, #tpu.memory_space<smem>>
    %2 = arith.subf %1, %0 : f32
    %cst = arith.constant 1.500000e+01 : f32
    %3 = arith.divf %2, %cst : f32
    %cst_0 = arith.constant 9.99999974E-5 : f32
    %4 = arith.maximumf %3, %cst_0 : f32
    %c0_1 = arith.constant 0 : index
    %c0_2 = arith.constant 0 : index
    %c0_3 = arith.constant 0 : index
    %5 = vector.load %arg3[%c0_1, %c0_2, %c0_3] : memref<1x7x256xf32, #tpu.memory_space<vmem>>, vector<1x7x256xf32>
    %6 = vector.shape_cast %5 : vector<1x7x256xf32> to vector<7x256xf32>
    %7 = vector.broadcast %0 : f32 to vector<7x256xf32>
    %8 = arith.subf %6, %7 : vector<7x256xf32>
    %9 = arith.subf %1, %0 : f32
    %cst_4 = arith.constant 9.99999974E-5 : f32
    %10 = arith.addf %9, %cst_4 : f32
    %cst_5 = arith.constant 1.500000e+01 : f32
    %11 = arith.divf %cst_5, %10 : f32
    %12 = vector.broadcast %11 : f32 to vector<7x256xf32>
    %13 = arith.mulf %8, %12 : vector<7x256xf32>
    %cst_6 = arith.constant 2.500000e+00 : f32
    %14 = vector.broadcast %cst_6 : f32 to vector<7x256xf32>
    %15 = arith.mulf %14, %13 : vector<7x256xf32>
    %c0_7 = arith.constant 0 : index
    %16 = memref.load %arg2[%c0_7] : memref<15xf32, #tpu.memory_space<smem>>
    %cst_8 = arith.constant 2.500000e+00 : f32
    %17 = arith.mulf %cst_8, %16 : f32
    %18 = vector.broadcast %17 : f32 to vector<7x256xf32>
    %19 = arith.subf %15, %18 : vector<7x256xf32>
    %20 = arith.truncf %19 : vector<7x256xf32> to vector<7x256xbf16>
    %21 = math.tanh %20 : vector<7x256xbf16>
    %22 = arith.extf %21 : vector<7x256xbf16> to vector<7x256xf32>
    %c1_9 = arith.constant 1 : index
    %23 = memref.load %arg2[%c1_9] : memref<15xf32, #tpu.memory_space<smem>>
    %cst_10 = arith.constant 2.500000e+00 : f32
    %24 = arith.mulf %cst_10, %23 : f32
    %25 = vector.broadcast %24 : f32 to vector<7x256xf32>
    %26 = arith.subf %15, %25 : vector<7x256xf32>
    %27 = arith.truncf %26 : vector<7x256xf32> to vector<7x256xbf16>
    %28 = math.tanh %27 : vector<7x256xbf16>
    %29 = arith.extf %28 : vector<7x256xbf16> to vector<7x256xf32>
    %c2 = arith.constant 2 : index
    %30 = memref.load %arg2[%c2] : memref<15xf32, #tpu.memory_space<smem>>
    %cst_11 = arith.constant 2.500000e+00 : f32
    %31 = arith.mulf %cst_11, %30 : f32
    %32 = vector.broadcast %31 : f32 to vector<7x256xf32>
    %33 = arith.subf %15, %32 : vector<7x256xf32>
    %34 = arith.truncf %33 : vector<7x256xf32> to vector<7x256xbf16>
    %35 = math.tanh %34 : vector<7x256xbf16>
    %36 = arith.extf %35 : vector<7x256xbf16> to vector<7x256xf32>
    %c3 = arith.constant 3 : index
    %37 = memref.load %arg2[%c3] : memref<15xf32, #tpu.memory_space<smem>>
    %cst_12 = arith.constant 2.500000e+00 : f32
    %38 = arith.mulf %cst_12, %37 : f32
    %39 = vector.broadcast %38 : f32 to vector<7x256xf32>
    %40 = arith.subf %15, %39 : vector<7x256xf32>
    %41 = arith.truncf %40 : vector<7x256xf32> to vector<7x256xbf16>
    %42 = math.tanh %41 : vector<7x256xbf16>
    %43 = arith.extf %42 : vector<7x256xbf16> to vector<7x256xf32>
    %44 = arith.addf %22, %43 : vector<7x256xf32>
    %c4 = arith.constant 4 : index
    %45 = memref.load %arg2[%c4] : memref<15xf32, #tpu.memory_space<smem>>
    %cst_13 = arith.constant 2.500000e+00 : f32
    %46 = arith.mulf %cst_13, %45 : f32
    %47 = vector.broadcast %46 : f32 to vector<7x256xf32>
    %48 = arith.subf %15, %47 : vector<7x256xf32>
    %49 = arith.truncf %48 : vector<7x256xf32> to vector<7x256xbf16>
    %50 = math.tanh %49 : vector<7x256xbf16>
    %51 = arith.extf %50 : vector<7x256xbf16> to vector<7x256xf32>
    %52 = arith.addf %29, %51 : vector<7x256xf32>
    %c5 = arith.constant 5 : index
    %53 = memref.load %arg2[%c5] : memref<15xf32, #tpu.memory_space<smem>>
    %cst_14 = arith.constant 2.500000e+00 : f32
    %54 = arith.mulf %cst_14, %53 : f32
    %55 = vector.broadcast %54 : f32 to vector<7x256xf32>
    %56 = arith.subf %15, %55 : vector<7x256xf32>
    %57 = arith.truncf %56 : vector<7x256xf32> to vector<7x256xbf16>
    %58 = math.tanh %57 : vector<7x256xbf16>
    %59 = arith.extf %58 : vector<7x256xbf16> to vector<7x256xf32>
    %60 = arith.addf %36, %59 : vector<7x256xf32>
    %c6 = arith.constant 6 : index
    %61 = memref.load %arg2[%c6] : memref<15xf32, #tpu.memory_space<smem>>
    %cst_15 = arith.constant 2.500000e+00 : f32
    %62 = arith.mulf %cst_15, %61 : f32
    %63 = vector.broadcast %62 : f32 to vector<7x256xf32>
    %64 = arith.subf %15, %63 : vector<7x256xf32>
    %65 = arith.truncf %64 : vector<7x256xf32> to vector<7x256xbf16>
    %66 = math.tanh %65 : vector<7x256xbf16>
    %67 = arith.extf %66 : vector<7x256xbf16> to vector<7x256xf32>
    %68 = arith.addf %44, %67 : vector<7x256xf32>
    %c7 = arith.constant 7 : index
    %69 = memref.load %arg2[%c7] : memref<15xf32, #tpu.memory_space<smem>>
    %cst_16 = arith.constant 2.500000e+00 : f32
    %70 = arith.mulf %cst_16, %69 : f32
    %71 = vector.broadcast %70 : f32 to vector<7x256xf32>
    %72 = arith.subf %15, %71 : vector<7x256xf32>
    %73 = arith.truncf %72 : vector<7x256xf32> to vector<7x256xbf16>
    %74 = math.tanh %73 : vector<7x256xbf16>
    %75 = arith.extf %74 : vector<7x256xbf16> to vector<7x256xf32>
    %76 = arith.addf %52, %75 : vector<7x256xf32>
    %c8 = arith.constant 8 : index
    %77 = memref.load %arg2[%c8] : memref<15xf32, #tpu.memory_space<smem>>
    %cst_17 = arith.constant 2.500000e+00 : f32
    %78 = arith.mulf %cst_17, %77 : f32
    %79 = vector.broadcast %78 : f32 to vector<7x256xf32>
    %80 = arith.subf %15, %79 : vector<7x256xf32>
    %81 = arith.truncf %80 : vector<7x256xf32> to vector<7x256xbf16>
    %82 = math.tanh %81 : vector<7x256xbf16>
    %83 = arith.extf %82 : vector<7x256xbf16> to vector<7x256xf32>
    %84 = arith.addf %60, %83 : vector<7x256xf32>
    %c9 = arith.constant 9 : index
    %85 = memref.load %arg2[%c9] : memref<15xf32, #tpu.memory_space<smem>>
    %cst_18 = arith.constant 2.500000e+00 : f32
    %86 = arith.mulf %cst_18, %85 : f32
    %87 = vector.broadcast %86 : f32 to vector<7x256xf32>
    %88 = arith.subf %15, %87 : vector<7x256xf32>
    %89 = arith.truncf %88 : vector<7x256xf32> to vector<7x256xbf16>
    %90 = math.tanh %89 : vector<7x256xbf16>
    %91 = arith.extf %90 : vector<7x256xbf16> to vector<7x256xf32>
    %92 = arith.addf %68, %91 : vector<7x256xf32>
    %c10 = arith.constant 10 : index
    %93 = memref.load %arg2[%c10] : memref<15xf32, #tpu.memory_space<smem>>
    %cst_19 = arith.constant 2.500000e+00 : f32
    %94 = arith.mulf %cst_19, %93 : f32
    %95 = vector.broadcast %94 : f32 to vector<7x256xf32>
    %96 = arith.subf %15, %95 : vector<7x256xf32>
    %97 = arith.truncf %96 : vector<7x256xf32> to vector<7x256xbf16>
    %98 = math.tanh %97 : vector<7x256xbf16>
    %99 = arith.extf %98 : vector<7x256xbf16> to vector<7x256xf32>
    %100 = arith.addf %76, %99 : vector<7x256xf32>
    %c11 = arith.constant 11 : index
    %101 = memref.load %arg2[%c11] : memref<15xf32, #tpu.memory_space<smem>>
    %cst_20 = arith.constant 2.500000e+00 : f32
    %102 = arith.mulf %cst_20, %101 : f32
    %103 = vector.broadcast %102 : f32 to vector<7x256xf32>
    %104 = arith.subf %15, %103 : vector<7x256xf32>
    %105 = arith.truncf %104 : vector<7x256xf32> to vector<7x256xbf16>
    %106 = math.tanh %105 : vector<7x256xbf16>
    %107 = arith.extf %106 : vector<7x256xbf16> to vector<7x256xf32>
    %108 = arith.addf %84, %107 : vector<7x256xf32>
    %c12 = arith.constant 12 : index
    %109 = memref.load %arg2[%c12] : memref<15xf32, #tpu.memory_space<smem>>
    %cst_21 = arith.constant 2.500000e+00 : f32
    %110 = arith.mulf %cst_21, %109 : f32
    %111 = vector.broadcast %110 : f32 to vector<7x256xf32>
    %112 = arith.subf %15, %111 : vector<7x256xf32>
    %113 = arith.truncf %112 : vector<7x256xf32> to vector<7x256xbf16>
    %114 = math.tanh %113 : vector<7x256xbf16>
    %115 = arith.extf %114 : vector<7x256xbf16> to vector<7x256xf32>
    %116 = arith.addf %92, %115 : vector<7x256xf32>
    %c13 = arith.constant 13 : index
    %117 = memref.load %arg2[%c13] : memref<15xf32, #tpu.memory_space<smem>>
    %cst_22 = arith.constant 2.500000e+00 : f32
    %118 = arith.mulf %cst_22, %117 : f32
    %119 = vector.broadcast %118 : f32 to vector<7x256xf32>
    %120 = arith.subf %15, %119 : vector<7x256xf32>
    %121 = arith.truncf %120 : vector<7x256xf32> to vector<7x256xbf16>
    %122 = math.tanh %121 : vector<7x256xbf16>
    %123 = arith.extf %122 : vector<7x256xbf16> to vector<7x256xf32>
    %124 = arith.addf %100, %123 : vector<7x256xf32>
    %c14 = arith.constant 14 : index
    %125 = memref.load %arg2[%c14] : memref<15xf32, #tpu.memory_space<smem>>
    %cst_23 = arith.constant 2.500000e+00 : f32
    %126 = arith.mulf %cst_23, %125 : f32
    %127 = vector.broadcast %126 : f32 to vector<7x256xf32>
    %128 = arith.subf %15, %127 : vector<7x256xf32>
    %129 = arith.truncf %128 : vector<7x256xf32> to vector<7x256xbf16>
    %130 = math.tanh %129 : vector<7x256xbf16>
    %131 = arith.extf %130 : vector<7x256xbf16> to vector<7x256xf32>
    %132 = arith.addf %108, %131 : vector<7x256xf32>
    %133 = arith.addf %116, %124 : vector<7x256xf32>
    %134 = arith.addf %133, %132 : vector<7x256xf32>
    %cst_24 = arith.constant 5.000000e-01 : f32
    %135 = vector.broadcast %cst_24 : f32 to vector<7x256xf32>
    %136 = arith.mulf %135, %134 : vector<7x256xf32>
    %cst_25 = arith.constant 7.500000e+00 : f32
    %137 = vector.broadcast %cst_25 : f32 to vector<7x256xf32>
    %138 = arith.addf %136, %137 : vector<7x256xf32>
    %139 = vector.broadcast %4 : f32 to vector<7x256xf32>
    %140 = arith.mulf %138, %139 : vector<7x256xf32>
    %141 = vector.broadcast %0 : f32 to vector<7x256xf32>
    %142 = arith.addf %140, %141 : vector<7x256xf32>
    %c0_26 = arith.constant 0 : index
    %c0_27 = arith.constant 0 : index
    %c0_28 = arith.constant 0 : index
    %143 = vector.load %arg4[%c0_26, %c0_27, %c0_28] : memref<1x7x256xf32, #tpu.memory_space<vmem>>, vector<1x7x256xf32>
    %144 = vector.shape_cast %143 : vector<1x7x256xf32> to vector<7x256xf32>
    %145 = vector.shape_cast %142 : vector<7x256xf32> to vector<1x7x256xf32>
    tpu.vector_store %arg4[%c0_26, %c0_27, %c0_28], %145 {strides = array<i32>} : memref<1x7x256xf32, #tpu.memory_space<vmem>>, vector<1x7x256xf32>,
    return
  }
  func.func @transform_0(%arg0: i32, %arg1: memref<2xf32, #tpu.memory_space<smem>>, %arg2: memref<15xf32, #tpu.memory_space<smem>>) -> (i32, i32, i32) {
    %c0_i32 = arith.constant 0 : i32
    %c0_i32_0 = arith.constant 0 : i32
    %c0_i32_1 = arith.constant 0 : i32
    return %arg0, %c0_i32, %c0_i32_0 : i32, i32, i32
  }
  func.func @transform_1(%arg0: i32, %arg1: memref<2xf32, #tpu.memory_space<smem>>, %arg2: memref<15xf32, #tpu.memory_space<smem>>) -> (i32, i32, i32) {
    %c0_i32 = arith.constant 0 : i32
    %c0_i32_0 = arith.constant 0 : i32
    %c0_i32_1 = arith.constant 0 : i32
    return %arg0, %c0_i32, %c0_i32_0 : i32, i32, i32
  }
}

</mosaic_0001>

<llo_original>
// kernel: degrad_forward.3
$region0: #{degrad_forward.3}
  #allocation0 [shape = 'u32[]', space=smem, size = 0x4, offset = 0x4, fixed_abs, tag = 'smem constant byte address 0x4 - core index']
  #allocation1 [shape = 'u32[144,128]{1,0:T(1,128)}', space=vmem, size = 0x12000, scoped, tag = 'internal scratch']
  #allocation2 [shape = 's32[1]{0}', space=sflag, size = 0x4, scoped, tag = 'scoped memory for degrad_forward.3']
  #allocation3 [shape = 'u8[512]{0}', space=smem, size = 0x200, scoped, tag = 'prefetched SMEM operand 0']
  #allocation4 [shape = 'u8[512]{0}', space=smem, size = 0x200, scoped, tag = 'prefetched SMEM operand 1']
  %s0 = inlined_call_operand.vmem [shape: f32[2], index: 0, kind: input, shape index: {}]
  %s1 = inlined_call_operand.vmem [shape: f32[15], index: 1, kind: input, shape index: {}]
  %s2 = inlined_call_operand.vmem [shape: f32[6,7,256], index: 2, kind: input, shape index: {}]
  %s3 = inlined_call_operand.vmem [shape: f32[6,7,256], index: 3, kind: output, shape index: {}]
  %s4 = sld [smem:[#allocation0]]
  $region37: #{degrad_forward.3} parent=0
    _
  %s6 = ssub.s32 1, %s4
  %s7 = scalar_select 0, %s6, %s4
  %s8 = sshll.u32 %s0, 4
  %s9 = int_to_ptr.vmem [resolvable:$true] %s8
  %11 = dma.vmem_to_smem %s9, 16, [#allocation3], [#allocation2]
  %s12 = sshll.u32 %s1, 4
  %s13 = int_to_ptr.vmem [resolvable:$true] %s12
  %15 = dma.vmem_to_smem %s13, 16, [#allocation4], [#allocation2]
  %16 = dma.done [#allocation2], 32
  %17 = sfence
  loop: start=0, step=1, limit=8
  $region2: #{degrad_forward.3} parent=0 // loop_pre_header
    _
  $region3: #{degrad_forward.3} parent=0 // loop_header
    %s19 = sphi 0, %s23
    %p20 = scmp.ge.s32.totalorder %s19, 8
    %s29 = sphi 0, %s31
    %s32 = sphi 0, %s29
    %s33 = sphi 0, %s32
    %s49 = sphi 0, %s33
    %s55 = sphi 0, %s57
    %s58 = sphi 0, %s55
    %s59 = sphi 0, %s58
    %s75 = sphi 0, %s59
  $region4: #{degrad_forward.3} parent=0 // loop_header_branch
    %22 = sbr.rel (%p20) target = $region8
  $region5: #{degrad_forward.3} parent=0 // loop_body
    %s24 = ssub.s32 %s19, 1
    %s25 = ssub.s32 %s19, 2
    %s26 = sadd.s32 %s19, 1
    %s27 = ssub.s32 %s19, %s26
    %p28 = scmp.eq.s32.totalorder %s27, 0
    %s30 = sadd.s32 %s29, 1
    %s31 = scalar_select %p28, %s29, %s30
    %p34 = pneg %p28
    %p35 = scmp.eq.s32.totalorder %s19, 5
    %p36 = por %p34, %p35
    %p37 = scmp.ne.s32.totalorder %s29, %s32
    %p38 = scmp.eq.s32.totalorder %s19, 0
    %p39 = por %p37, %p38
    %p40 = scmp.ne.s32.totalorder %s29, %s32
    %p41 = scmp.eq.s32.totalorder %s24, 5
    %p42 = por %p40, %p41
    %p43 = scmp.ne.s32.totalorder %s32, %s33
    %p44 = scmp.eq.s32.totalorder %s24, 0
    %p45 = por %p43, %p44
    %p46 = scmp.ne.s32.totalorder %s32, %s33
    %p47 = scmp.eq.s32.totalorder %s25, 5
    %p48 = por %p46, %p47
    %p50 = scmp.ne.s32.totalorder %s33, %s49
    %p51 = scmp.eq.s32.totalorder %s25, 0
    %p52 = por %p50, %p51
    %s53 = ssub.s32 %s19, %s26
    %p54 = scmp.eq.s32.totalorder %s53, 0
    %s56 = sadd.s32 %s55, 1
    %s57 = scalar_select %p54, %s55, %s56
    %p60 = pneg %p54
    %p61 = scmp.eq.s32.totalorder %s19, 5
    %p62 = por %p60, %p61
    %p63 = scmp.ne.s32.totalorder %s55, %s58
    %p64 = scmp.eq.s32.totalorder %s19, 0
    %p65 = por %p63, %p64
    %p66 = scmp.ne.s32.totalorder %s55, %s58
    %p67 = scmp.eq.s32.totalorder %s24, 5
    %p68 = por %p66, %p67
    %p69 = scmp.ne.s32.totalorder %s58, %s59
    %p70 = scmp.eq.s32.totalorder %s24, 0
    %p71 = por %p69, %p70
    %p72 = scmp.ne.s32.totalorder %s58, %s59
    %p73 = scmp.eq.s32.totalorder %s25, 5
    %p74 = por %p72, %p73
    %p76 = scmp.ne.s32.totalorder %s59, %s75
    %p77 = scmp.eq.s32.totalorder %s25, 0
    %p78 = por %p76, %p77
    %p79 = scmp.le.s32.totalorder 1, %s19
    %p80 = scmp.lt.s32.totalorder %s19, 7
    %p81 = pnand %p79, %p80
    %p82 = pneg %p81
    // Predicated region
    $region9: #{degrad_forward.3} parent=5 // pred_check
      _
    $region10: #{degrad_forward.3} parent=5 // pred_check_branch
      %84 = sbr.rel (%p81) target = $region12
    $region11: #{degrad_forward.3} parent=5 // pred_region
      %s85 = ssub.s32 %s19, 1
    $region12: #{degrad_forward.3} parent=5 // pred_fallthru
      _
    %p86 = scmp.lt.s32.totalorder %s19, 6
    // Predicated region
    $region13: #{degrad_forward.3} parent=5 // pred_check
      %p87 = pneg %p86
    $region14: #{degrad_forward.3} parent=5 // pred_check_branch
      %89 = sbr.rel (%p87) target = $region16
    $region15: #{degrad_forward.3} parent=5 // pred_region
      // Predicated region
      $region17: #{degrad_forward.3} parent=15 // pred_check
        %p90 = pneg %p39
      $region18: #{degrad_forward.3} parent=15 // pred_check_branch
        %92 = sbr.rel (%p90) target = $region20
      $region19: #{degrad_forward.3} parent=15 // pred_region
        %p93 = scmp.lt.s32.totalorder %s19, 5
        %s94 = scalar_select %p93, %s19, 5
        %s95 = smul.addr %s94, 2
        %s96 = smul.addr %s95, 8
        %s97 = scalar_lea.vmem %s2, %s96
      $region20: #{degrad_forward.3} parent=15 // pred_fallthru
        _
    $region16: #{degrad_forward.3} parent=5 // pred_fallthru
      _
    %p98 = scmp.le.s32.totalorder 1, %s19
    %p99 = scmp.lt.s32.totalorder %s19, 7
    %p100 = pnand %p98, %p99
    %p101 = pneg %p100
    // Predicated region
    $region21: #{degrad_forward.3} parent=5 // pred_check
      _
    $region22: #{degrad_forward.3} parent=5 // pred_check_branch
      %103 = sbr.rel (%p100) target = $region24
    $region23: #{degrad_forward.3} parent=5 // pred_region
      %s104 = ssub.s32 %s19, 1
      %p105 = scmp.lt.s32.totalorder %s24, 5
      %s106 = scalar_select %p105, %s24, 5
      %s107 = smul.addr %s106, 2
      %s108 = smul.addr %s107, 8
      %s109 = scalar_lea.vmem %s2, %s108
      %p110 = pneg %p45
      %p111 = pneg %p42
      %p112 = pneg %p71
      %p113 = pneg %p68
      %p114 = scmp.lt.s32.totalorder %s24, 5
      %s115 = scalar_select %p114, %s24, 5
      %s116 = smul.addr %s115, 2
      %s117 = smul.addr %s116, 8
      %s118 = scalar_lea.vmem %s3, %s117
      %p119 = scmp.lt.s32.totalorder %s24, 5
      %s120 = scalar_select %p119, %s24, 5
      %s121 = smul.addr %s120, 2
      %s122 = smul.addr %s121, 8
      %s123 = scalar_lea.vmem %s2, %s122
      %p124 = scmp.lt.s32.totalorder %s24, 5
      %s125 = scalar_select %p124, %s24, 5
      %s126 = smul.addr %s125, 2
      %s127 = smul.addr %s126, 8
      %s128 = scalar_lea.vmem %s3, %s127
      %s129 = sld [smem:[#allocation3]]
      %s130 = sld [smem:[#allocation3 + $0x1]]
      %s131 = ssub.f32 %s130, %s129
      %v132 = vrcp.pop 15.0
      %s133 = vtos %v132
      %s134 = smul.f32 %s131, %s133
      %s135 = smax.f32 %s134, 0.0001
      %v136 = vld [vmem:[%s123] sm:$0x7f]
      %v137 = vld [vmem:[%s123 + $0x8] sm:$0x7f]
      %v138 = vstv %s129
      %v139 = vsub.f32 %v136, %v138
      %v140 = vsub.f32 %v137, %v138
      %s141 = sadd.f32 %s131, 0.0001
      %v142 = vstv %s141
      %v143 = vrcp.pop %v142
      %s144 = vtos %v143
      %s145 = smul.f32 15.0, %s144
      %v146 = vstv %s145
      %v147 = vmul.f32 %v139, %v146
      %v148 = vmul.f32 %v140, %v146
      %v149 = vmul.f32 %v147, 2.5
      %v150 = vmul.f32 %v148, 2.5
      %s151 = sld [smem:[#allocation4]]
      %s152 = smul.f32 %s151, 2.5
      %v153 = vstv %s152
      %v154 = vsub.f32 %v149, %v153
      %v155 = vsub.f32 %v150, %v153
      %v156 = vpack.c.bf16 %v154, %v154
      %v157 = vpack.c.bf16 %v155, %v155
      %v158 = vtanh.bf16.pop %v156
      %v159 = vtanh.bf16.pop %v157
      %v160 = vunpack.c.l.bf16 %v158
      %v161 = vunpack.c.l.bf16 %v159
      %s162 = sld [smem:[#allocation4 + $0x1]]
      %s163 = smul.f32 %s162, 2.5
      %v164 = vstv %s163
      %v165 = vsub.f32 %v149, %v164
      %v166 = vsub.f32 %v150, %v164
      %v167 = vpack.c.bf16 %v165, %v165
      %v168 = vpack.c.bf16 %v166, %v166
      %v169 = vtanh.bf16.pop %v167
      %v170 = vtanh.bf16.pop %v168
      %v171 = vunpack.c.l.bf16 %v169
      %v172 = vunpack.c.l.bf16 %v170
      %s173 = sld [smem:[#allocation4 + $0x2]]
      %s174 = smul.f32 %s173, 2.5
      %v175 = vstv %s174
      %v176 = vsub.f32 %v149, %v175
      %v177 = vsub.f32 %v150, %v175
      %v178 = vpack.c.bf16 %v176, %v176
      %v179 = vpack.c.bf16 %v177, %v177
      %v180 = vtanh.bf16.pop %v178
      %v181 = vtanh.bf16.pop %v179
      %v182 = vunpack.c.l.bf16 %v180
      %v183 = vunpack.c.l.bf16 %v181
      %s184 = sld [smem:[#allocation4 + $0x3]]
      %s185 = smul.f32 %s184, 2.5
      %v186 = vstv %s185
      %v187 = vsub.f32 %v149, %v186
      %v188 = vsub.f32 %v150, %v186
      %v189 = vpack.c.bf16 %v187, %v187
      %v190 = vpack.c.bf16 %v188, %v188
      %v191 = vtanh.bf16.pop %v189
      %v192 = vtanh.bf16.pop %v190
      %v193 = vunpack.c.l.bf16 %v191
      %v194 = vunpack.c.l.bf16 %v192
      %v195 = vadd.f32 %v160, %v193
      %v196 = vadd.f32 %v161, %v194
      %s197 = sld [smem:[#allocation4 + $0x4]]
      %s198 = smul.f32 %s197, 2.5
      %v199 = vstv %s198
      %v200 = vsub.f32 %v149, %v199
      %v201 = vsub.f32 %v150, %v199
      %v202 = vpack.c.bf16 %v200, %v200
      %v203 = vpack.c.bf16 %v201, %v201
      %v204 = vtanh.bf16.pop %v202
      %v205 = vtanh.bf16.pop %v203
      %v206 = vunpack.c.l.bf16 %v204
      %v207 = vunpack.c.l.bf16 %v205
      %v208 = vadd.f32 %v171, %v206
      %v209 = vadd.f32 %v172, %v207
      %s210 = sld [smem:[#allocation4 + $0x5]]
      %s211 = smul.f32 %s210, 2.5
      %v212 = vstv %s211
      %v213 = vsub.f32 %v149, %v212
      %v214 = vsub.f32 %v150, %v212
      %v215 = vpack.c.bf16 %v213, %v213
      %v216 = vpack.c.bf16 %v214, %v214
      %v217 = vtanh.bf16.pop %v215
      %v218 = vtanh.bf16.pop %v216
      %v219 = vunpack.c.l.bf16 %v217
      %v220 = vunpack.c.l.bf16 %v218
      %v221 = vadd.f32 %v182, %v219
      %v222 = vadd.f32 %v183, %v220
      %s223 = sld [smem:[#allocation4 + $0x6]]
      %s224 = smul.f32 %s223, 2.5
      %v225 = vstv %s224
      %v226 = vsub.f32 %v149, %v225
      %v227 = vsub.f32 %v150, %v225
      %v228 = vpack.c.bf16 %v226, %v226
      %v229 = vpack.c.bf16 %v227, %v227
      %v230 = vtanh.bf16.pop %v228
      %v231 = vtanh.bf16.pop %v229
      %v232 = vunpack.c.l.bf16 %v230
      %v233 = vunpack.c.l.bf16 %v231
      %v234 = vadd.f32 %v195, %v232
      %v235 = vadd.f32 %v196, %v233
      %s236 = sld [smem:[#allocation4 + $0x7]]
      %s237 = smul.f32 %s236, 2.5
      %v238 = vstv %s237
      %v239 = vsub.f32 %v149, %v238
      %v240 = vsub.f32 %v150, %v238
      %v241 = vpack.c.bf16 %v239, %v239
      %v242 = vpack.c.bf16 %v240, %v240
      %v243 = vtanh.bf16.pop %v241
      %v244 = vtanh.bf16.pop %v242
      %v245 = vunpack.c.l.bf16 %v243
      %v246 = vunpack.c.l.bf16 %v244
      %v247 = vadd.f32 %v208, %v245
      %v248 = vadd.f32 %v209, %v246
      %s249 = sld [smem:[#allocation4 + $0x8]]
      %s250 = smul.f32 %s249, 2.5
      %v251 = vstv %s250
      %v252 = vsub.f32 %v149, %v251
      %v253 = vsub.f32 %v150, %v251
      %v254 = vpack.c.bf16 %v252, %v252
      %v255 = vpack.c.bf16 %v253, %v253
      %v256 = vtanh.bf16.pop %v254
      %v257 = vtanh.bf16.pop %v255
      %v258 = vunpack.c.l.bf16 %v256
      %v259 = vunpack.c.l.bf16 %v257
      %v260 = vadd.f32 %v221, %v258
      %v261 = vadd.f32 %v222, %v259
      %s262 = sld [smem:[#allocation4 + $0x9]]
      %s263 = smul.f32 %s262, 2.5
      %v264 = vstv %s263
      %v265 = vsub.f32 %v149, %v264
      %v266 = vsub.f32 %v150, %v264
      %v267 = vpack.c.bf16 %v265, %v265
      %v268 = vpack.c.bf16 %v266, %v266
      %v269 = vtanh.bf16.pop %v267
      %v270 = vtanh.bf16.pop %v268
      %v271 = vunpack.c.l.bf16 %v269
      %v272 = vunpack.c.l.bf16 %v270
      %v273 = vadd.f32 %v234, %v271
      %v274 = vadd.f32 %v235, %v272
      %s275 = sld [smem:[#allocation4 + $0xa]]
      %s276 = smul.f32 %s275, 2.5
      %v277 = vstv %s276
      %v278 = vsub.f32 %v149, %v277
      %v279 = vsub.f32 %v150, %v277
      %v280 = vpack.c.bf16 %v278, %v278
      %v281 = vpack.c.bf16 %v279, %v279
      %v282 = vtanh.bf16.pop %v280
      %v283 = vtanh.bf16.pop %v281
      %v284 = vunpack.c.l.bf16 %v282
      %v285 = vunpack.c.l.bf16 %v283
      %v286 = vadd.f32 %v247, %v284
      %v287 = vadd.f32 %v248, %v285
      %s288 = sld [smem:[#allocation4 + $0xb]]
      %s289 = smul.f32 %s288, 2.5
      %v290 = vstv %s289
      %v291 = vsub.f32 %v149, %v290
      %v292 = vsub.f32 %v150, %v290
      %v293 = vpack.c.bf16 %v291, %v291
      %v294 = vpack.c.bf16 %v292, %v292
      %v295 = vtanh.bf16.pop %v293
      %v296 = vtanh.bf16.pop %v294
      %v297 = vunpack.c.l.bf16 %v295
      %v298 = vunpack.c.l.bf16 %v296
      %v299 = vadd.f32 %v260, %v297
      %v300 = vadd.f32 %v261, %v298
      %s301 = sld [smem:[#allocation4 + $0xc]]
      %s302 = smul.f32 %s301, 2.5
      %v303 = vstv %s302
      %v304 = vsub.f32 %v149, %v303
      %v305 = vsub.f32 %v150, %v303
      %v306 = vpack.c.bf16 %v304, %v304
      %v307 = vpack.c.bf16 %v305, %v305
      %v308 = vtanh.bf16.pop %v306
      %v309 = vtanh.bf16.pop %v307
      %v310 = vunpack.c.l.bf16 %v308
      %v311 = vunpack.c.l.bf16 %v309
      %v312 = vadd.f32 %v273, %v310
      %v313 = vadd.f32 %v274, %v311
      %s314 = sld [smem:[#allocation4 + $0xd]]
      %s315 = smul.f32 %s314, 2.5
      %v316 = vstv %s315
      %v317 = vsub.f32 %v149, %v316
      %v318 = vsub.f32 %v150, %v316
      %v319 = vpack.c.bf16 %v317, %v317
      %v320 = vpack.c.bf16 %v318, %v318
      %v321 = vtanh.bf16.pop %v319
      %v322 = vtanh.bf16.pop %v320
      %v323 = vunpack.c.l.bf16 %v321
      %v324 = vunpack.c.l.bf16 %v322
      %v325 = vadd.f32 %v286, %v323
      %v326 = vadd.f32 %v287, %v324
      %s327 = sld [smem:[#allocation4 + $0xe]]
      %s328 = smul.f32 %s327, 2.5
      %v329 = vstv %s328
      %v330 = vsub.f32 %v149, %v329
      %v331 = vsub.f32 %v150, %v329
      %v332 = vpack.c.bf16 %v330, %v330
      %v333 = vpack.c.bf16 %v331, %v331
      %v334 = vtanh.bf16.pop %v332
      %v335 = vtanh.bf16.pop %v333
      %v336 = vunpack.c.l.bf16 %v334
      %v337 = vunpack.c.l.bf16 %v335
      %v338 = vadd.f32 %v299, %v336
      %v339 = vadd.f32 %v300, %v337
      %v340 = vadd.f32 %v312, %v325
      %v341 = vadd.f32 %v313, %v326
      %v342 = vadd.f32 %v340, %v338
      %v343 = vadd.f32 %v341, %v339
      %v344 = vmul.f32 %v342, 0.5
      %v345 = vmul.f32 %v343, 0.5
      %v346 = vadd.f32 %v344, 7.5
      %v347 = vadd.f32 %v345, 7.5
      %v348 = vstv %s135
      %v349 = vmul.f32 %v346, %v348
      %v350 = vmul.f32 %v347, %v348
      %v351 = vadd.f32 %v349, %v138
      %v352 = vadd.f32 %v350, %v138
      %353 = vst [vmem:[%s128] sm:$0x7f] %v351
      %354 = vst [vmem:[%s128 + $0x8] sm:$0x7f] %v352
      %p355 = scmp.lt.s32.totalorder %s24, 5
      %s356 = scalar_select %p355, %s24, 5
      %s357 = smul.addr %s356, 2
      %s358 = smul.addr %s357, 8
      %s359 = scalar_lea.vmem %s3, %s358
      // Predicated region
      $region25: #{degrad_forward.3} parent=23 // pred_check
        %p360 = pneg %p68
      $region26: #{degrad_forward.3} parent=23 // pred_check_branch
        %362 = sbr.rel (%p360) target = $region28
      $region27: #{degrad_forward.3} parent=23 // pred_region
        _
      $region28: #{degrad_forward.3} parent=23 // pred_fallthru
        _
    $region24: #{degrad_forward.3} parent=5 // pred_fallthru
      _
    %p363 = scmp.le.s32.totalorder 2, %s19
    // Predicated region
    $region29: #{degrad_forward.3} parent=5 // pred_check
      %p364 = pneg %p363
    $region30: #{degrad_forward.3} parent=5 // pred_check_branch
      %366 = sbr.rel (%p364) target = $region32
    $region31: #{degrad_forward.3} parent=5 // pred_region
      %s367 = ssub.s32 %s19, 2
      // Predicated region
      $region33: #{degrad_forward.3} parent=31 // pred_check
        %p368 = pneg %p74
      $region34: #{degrad_forward.3} parent=31 // pred_check_branch
        %370 = sbr.rel (%p368) target = $region36
      $region35: #{degrad_forward.3} parent=31 // pred_region
        %p371 = scmp.lt.s32.totalorder %s25, 5
        %s372 = scalar_select %p371, %s25, 5
        %s373 = smul.addr %s372, 2
        %s374 = smul.addr %s373, 8
        %s375 = scalar_lea.vmem %s3, %s374
      $region36: #{degrad_forward.3} parent=31 // pred_fallthru
        _
    $region32: #{degrad_forward.3} parent=5 // pred_fallthru
      _
  $region6: #{degrad_forward.3} parent=0 // loop_footer
    %s23 = sadd.s32 1, %s19
  $region7: #{degrad_forward.3} parent=0 // loop_footer_branch
    %18 = sbr.rel target = $region3
  $region8: #{degrad_forward.3} parent=0 // loop_exit
    _

// kernel: degrad_forward.2
$region0: #{degrad_forward.2}
  #allocation0 [shape = 'u32[]', space=smem, size = 0x4, offset = 0x4, fixed_abs, tag = 'smem constant byte address 0x4 - core index']
  #allocation1 [shape = 'u32[144,128]{1,0:T(1,128)}', space=vmem, size = 0x12000, scoped, tag = 'internal scratch']
  #allocation2 [shape = 'f32[8,512]{1,0:T(8,128)}', space=vmem, size = 0x4000, scoped, tag = 'scratch operand']
  %s0 = inlined_call_operand.vmem [shape: f32[6,8,256], index: 0, kind: input, shape index: {}]
  %s1 = inlined_call_operand.vmem [shape: f32[6,7,256], index: 1, kind: output, shape index: {0}]
  %s2 = inlined_call_operand.vmem [shape: f32[6,2,128], index: 2, kind: output, shape index: {1}]
  %3 = xla_tuple %s1, %s2
  %s4 = sld [smem:[#allocation0]]
  $region45: #{degrad_forward.2} parent=0
    _
  %s6 = ssub.s32 1, %s4
  %s7 = scalar_select 0, %s6, %s4
  loop: start=0, step=1, limit=8
  $region2: #{degrad_forward.2} parent=0 // loop_pre_header
    _
  $region3: #{degrad_forward.2} parent=0 // loop_header
    %s9 = sphi 0, %s13
    %p10 = scmp.ge.s32.totalorder %s9, 8
    %s19 = sphi 0, %s21
    %s22 = sphi 0, %s19
    %s23 = sphi 0, %s22
    %s39 = sphi 0, %s23
    %s45 = sphi 0, %s47
    %s48 = sphi 0, %s45
    %s49 = sphi 0, %s48
    %s65 = sphi 0, %s49
    %s71 = sphi 0, %s73
    %s74 = sphi 0, %s71
    %s75 = sphi 0, %s74
    %s91 = sphi 0, %s75
  $region4: #{degrad_forward.2} parent=0 // loop_header_branch
    %12 = sbr.rel (%p10) target = $region8
  $region5: #{degrad_forward.2} parent=0 // loop_body
    %s14 = ssub.s32 %s9, 1
    %s15 = ssub.s32 %s9, 2
    %s16 = sadd.s32 %s9, 1
    %s17 = ssub.s32 %s9, %s16
    %p18 = scmp.eq.s32.totalorder %s17, 0
    %s20 = sadd.s32 %s19, 1
    %s21 = scalar_select %p18, %s19, %s20
    %p24 = pneg %p18
    %p25 = scmp.eq.s32.totalorder %s9, 5
    %p26 = por %p24, %p25
    %p27 = scmp.ne.s32.totalorder %s19, %s22
    %p28 = scmp.eq.s32.totalorder %s9, 0
    %p29 = por %p27, %p28
    %p30 = scmp.ne.s32.totalorder %s19, %s22
    %p31 = scmp.eq.s32.totalorder %s14, 5
    %p32 = por %p30, %p31
    %p33 = scmp.ne.s32.totalorder %s22, %s23
    %p34 = scmp.eq.s32.totalorder %s14, 0
    %p35 = por %p33, %p34
    %p36 = scmp.ne.s32.totalorder %s22, %s23
    %p37 = scmp.eq.s32.totalorder %s15, 5
    %p38 = por %p36, %p37
    %p40 = scmp.ne.s32.totalorder %s23, %s39
    %p41 = scmp.eq.s32.totalorder %s15, 0
    %p42 = por %p40, %p41
    %s43 = ssub.s32 %s9, %s16
    %p44 = scmp.eq.s32.totalorder %s43, 0
    %s46 = sadd.s32 %s45, 1
    %s47 = scalar_select %p44, %s45, %s46
    %p50 = pneg %p44
    %p51 = scmp.eq.s32.totalorder %s9, 5
    %p52 = por %p50, %p51
    %p53 = scmp.ne.s32.totalorder %s45, %s48
    %p54 = scmp.eq.s32.totalorder %s9, 0
    %p55 = por %p53, %p54
    %p56 = scmp.ne.s32.totalorder %s45, %s48
    %p57 = scmp.eq.s32.totalorder %s14, 5
    %p58 = por %p56, %p57
    %p59 = scmp.ne.s32.totalorder %s48, %s49
    %p60 = scmp.eq.s32.totalorder %s14, 0
    %p61 = por %p59, %p60
    %p62 = scmp.ne.s32.totalorder %s48, %s49
    %p63 = scmp.eq.s32.totalorder %s15, 5
    %p64 = por %p62, %p63
    %p66 = scmp.ne.s32.totalorder %s49, %s65
    %p67 = scmp.eq.s32.totalorder %s15, 0
    %p68 = por %p66, %p67
    %s69 = ssub.s32 %s9, %s16
    %p70 = scmp.eq.s32.totalorder %s69, 0
    %s72 = sadd.s32 %s71, 1
    %s73 = scalar_select %p70, %s71, %s72
    %p76 = pneg %p70
    %p77 = scmp.eq.s32.totalorder %s9, 5
    %p78 = por %p76, %p77
    %p79 = scmp.ne.s32.totalorder %s71, %s74
    %p80 = scmp.eq.s32.totalorder %s9, 0
    %p81 = por %p79, %p80
    %p82 = scmp.ne.s32.totalorder %s71, %s74
    %p83 = scmp.eq.s32.totalorder %s14, 5
    %p84 = por %p82, %p83
    %p85 = scmp.ne.s32.totalorder %s74, %s75
    %p86 = scmp.eq.s32.totalorder %s14, 0
    %p87 = por %p85, %p86
    %p88 = scmp.ne.s32.totalorder %s74, %s75
    %p89 = scmp.eq.s32.totalorder %s15, 5
    %p90 = por %p88, %p89
    %p92 = scmp.ne.s32.totalorder %s75, %s91
    %p93 = scmp.eq.s32.totalorder %s15, 0
    %p94 = por %p92, %p93
    %p95 = scmp.le.s32.totalorder 1, %s9
    %p96 = scmp.lt.s32.totalorder %s9, 7
    %p97 = pnand %p95, %p96
    %p98 = pneg %p97
    // Predicated region
    $region9: #{degrad_forward.2} parent=5 // pred_check
      _
    $region10: #{degrad_forward.2} parent=5 // pred_check_branch
      %100 = sbr.rel (%p97) target = $region12
    $region11: #{degrad_forward.2} parent=5 // pred_region
      %s101 = ssub.s32 %s9, 1
    $region12: #{degrad_forward.2} parent=5 // pred_fallthru
      _
    %p102 = scmp.lt.s32.totalorder %s9, 6
    // Predicated region
    $region13: #{degrad_forward.2} parent=5 // pred_check
      %p103 = pneg %p102
    $region14: #{degrad_forward.2} parent=5 // pred_check_branch
      %105 = sbr.rel (%p103) target = $region16
    $region15: #{degrad_forward.2} parent=5 // pred_region
      // Predicated region
      $region17: #{degrad_forward.2} parent=15 // pred_check
        %p106 = pneg %p29
      $region18: #{degrad_forward.2} parent=15 // pred_check_branch
        %108 = sbr.rel (%p106) target = $region20
      $region19: #{degrad_forward.2} parent=15 // pred_region
        %p109 = scmp.lt.s32.totalorder %s9, 5
        %s110 = scalar_select %p109, %s9, 5
        %s111 = smul.addr %s110, 2
        %s112 = smul.addr %s111, 8
        %s113 = scalar_lea.vmem %s0, %s112
      $region20: #{degrad_forward.2} parent=15 // pred_fallthru
        _
    $region16: #{degrad_forward.2} parent=5 // pred_fallthru
      _
    %p114 = scmp.le.s32.totalorder 1, %s9
    %p115 = scmp.lt.s32.totalorder %s9, 7
    %p116 = pnand %p114, %p115
    %p117 = pneg %p116
    // Predicated region
    $region21: #{degrad_forward.2} parent=5 // pred_check
      _
    $region22: #{degrad_forward.2} parent=5 // pred_check_branch
      %119 = sbr.rel (%p116) target = $region24
    $region23: #{degrad_forward.2} parent=5 // pred_region
      %s120 = ssub.s32 %s9, 1
      %p121 = scmp.lt.s32.totalorder %s14, 5
      %s122 = scalar_select %p121, %s14, 5
      %s123 = smul.addr %s122, 2
      %s124 = smul.addr %s123, 8
      %s125 = scalar_lea.vmem %s0, %s124
      %p126 = pneg %p35
      %p127 = pneg %p32
      %p128 = pneg %p61
      %p129 = pneg %p58
      %p130 = scmp.lt.s32.totalorder %s14, 5
      %s131 = scalar_select %p130, %s14, 5
      %s132 = smul.addr %s131, 2
      %s133 = smul.addr %s132, 8
      %s134 = scalar_lea.vmem %s1, %s133
      %p135 = pneg %p87
      %p136 = pneg %p84
      %p137 = scmp.lt.s32.totalorder %s14, 5
      %s138 = scalar_select %p137, %s14, 5
      %s139 = smul.addr %s138, 2
      %s140 = scalar_lea.vmem %s2, %s139
      %p141 = scmp.lt.s32.totalorder %s14, 5
      %s142 = scalar_select %p141, %s14, 5
      %s143 = smul.addr %s142, 2
      %s144 = smul.addr %s143, 8
      %s145 = scalar_lea.vmem %s0, %s144
      %p146 = scmp.lt.s32.totalorder %s14, 5
      %s147 = scalar_select %p146, %s14, 5
      %s148 = smul.addr %s147, 2
      %s149 = smul.addr %s148, 8
      %s150 = scalar_lea.vmem %s1, %s149
      %p151 = scmp.lt.s32.totalorder %s14, 5
      %s152 = scalar_select %p151, %s14, 5
      %s153 = smul.addr %s152, 2
      %s154 = scalar_lea.vmem %s2, %s153
      %155 = vst [vmem:[#allocation2] sm:$0xff] 0.0
      %156 = vst [vmem:[#allocation2 + $0x18] sm:$0xff] 0.0
      %v157 = vld [vmem:[%s145] sm:$0xff]
      %v158 = vld [vmem:[%s145 + $0x8] sm:$0xff]
      %159 = vst [vmem:[#allocation2 + $0x8] sm:$0xff] %v157
      %160 = vst [vmem:[#allocation2 + $0x10] sm:$0xff] %v158
      %v161 = vld [vmem:[#allocation2] sm:$0xff]
      %v162 = vld [vmem:[#allocation2 + $0x8] sm:$0xff]
      %v163 = vld [vmem:[#allocation2 + $0x10] sm:$0xff]
      %v164 = vmul.f32 %v161, 0.17820325
      %v165 = vmul.f32 %v162, 0.17820325
      %v166 = vmul.f32 %v163, 0.17820325
      %v167 = vmul.f32 %v161, 0.21052228
      %v168 = vmul.f32 %v162, 0.21052228
      %v169 = vmul.f32 %v163, 0.21052228
      %173 = vrot.lane.b32.xlu0 %v167, 112
      %v174 = vpop.permute.xlu0 %173
      %175 = vrot.lane.b32.xlu0 %v168, 112
      %v176 = vpop.permute.xlu0 %175
      %177 = vrot.lane.b32.xlu0 %v169, 112
      %v178 = vpop.permute.xlu0 %177
      %vm179 = vcmask 916480
      %v180 = vsel %vm179, %v174, %v176
      %v181 = vsel %vm179, %v176, %v178
      %v185 = vadd.f32 %v164, %v180
      %v186 = vadd.f32 %v165, %v181
      %v187 = vadd.f32 %v166, %v178
      %v188 = vmul.f32 %v162, 0.22254893
      %v189 = vmul.f32 %v163, 0.22254893
      %192 = vrot.lane.b32.xlu0 %v188, 96
      %v193 = vpop.permute.xlu0 %192
      %194 = vrot.lane.b32.xlu0 %v189, 96
      %v195 = vpop.permute.xlu0 %194
      %vm196 = vcmask 785408
      %v197 = vsel %vm196, %v193, %v195
      %v201 = vadd.f32 %v185, %v193
      %v202 = vadd.f32 %v186, %v197
      %v203 = vadd.f32 %v187, %v195
      %v204 = vld [vmem:[#allocation2 + $0x8] sm:$0xff]
      %v205 = vld [vmem:[#allocation2 + $0x10] sm:$0xff]
      %v206 = vld [vmem:[#allocation2 + $0x18] sm:$0xff]
      %v207 = vmul.f32 %v204, 0.21052228
      %v208 = vmul.f32 %v205, 0.21052228
      %v209 = vmul.f32 %v206, 0.21052228
      %213 = vrot.lane.b32.xlu0 %v207, 80
      %v214 = vpop.permute.xlu0 %213
      %215 = vrot.lane.b32.xlu0 %v208, 80
      %v216 = vpop.permute.xlu0 %215
      %217 = vrot.lane.b32.xlu0 %v209, 80
      %v218 = vpop.permute.xlu0 %217
      %vm219 = vcmask 654336
      %v220 = vsel %vm219, %v214, %v216
      %v221 = vsel %vm219, %v216, %v218
      %v225 = vadd.f32 %v201, %v214
      %v226 = vadd.f32 %v202, %v220
      %v227 = vadd.f32 %v203, %v221
      %v228 = vmul.f32 %v204, 0.17820325
      %v229 = vmul.f32 %v205, 0.17820325
      %v230 = vmul.f32 %v206, 0.17820325
      %234 = vrot.lane.b32.xlu0 %v228, 64
      %v235 = vpop.permute.xlu0 %234
      %236 = vrot.lane.b32.xlu0 %v229, 64
      %v237 = vpop.permute.xlu0 %236
      %238 = vrot.lane.b32.xlu0 %v230, 64
      %v239 = vpop.permute.xlu0 %238
      %vm240 = vcmask 523264
      %v241 = vsel %vm240, %v235, %v237
      %v242 = vsel %vm240, %v237, %v239
      %v246 = vadd.f32 %v225, %v235
      %v247 = vadd.f32 %v226, %v241
      %v248 = vadd.f32 %v227, %v242
      %252 = vrot.lane.b32.xlu0 %v246, 32
      %v253 = vpop.permute.xlu0 %252
      %254 = vrot.lane.b32.xlu0 %v247, 32
      %v255 = vpop.permute.xlu0 %254
      %256 = vrot.lane.b32.xlu0 %v248, 32
      %v257 = vpop.permute.xlu0 %256
      %vm258 = vcmask 261120
      %v259 = vsel %vm258, %v253, %v255
      %v260 = vsel %vm258, %v255, %v257
      %263 = vst [vmem:[#allocation2 + $0x8] sm:$0xff] %v259
      %264 = vst [vmem:[#allocation2 + $0x10] sm:$0xff] %v260
      %v265 = vlaneseq
      %v266 = vand.u32 %v265, 127
      %v267 = vadd.s32 %v266, 128
      %v268 = vand.u32 %v266, 15
      %v269 = vand.u32 %v267, 15
      %v270 = vmul.f32 %v246, 0.22254893
      %v271 = vmul.f32 %v247, 0.22254893
      %v272 = vmul.f32 %v248, 0.22254893
      %vm273 = vcmp.ge.s32.totalorder %v268, 2
      %vm274 = vcmp.ge.s32.totalorder %v269, 2
      %v275 = vsel %vm273, 0.17820325, 0.0
      %v276 = vsel %vm274, 0.17820325, 0.0
      %v277 = vld [vmem:[#allocation2] sm:$0xff]
      %v278 = vld [vmem:[#allocation2 + $0x8] sm:$0xff]
      %v279 = vld [vmem:[#allocation2 + $0x10] sm:$0xff]
      %282 = vrot.lane.b32.xlu0 %v275, 126
      %v283 = vpop.permute.xlu0 %282
      %284 = vrot.lane.b32.xlu0 %v276, 126
      %v285 = vpop.permute.xlu0 %284
      %vm286 = vcmask 1031168
      %v287 = vsel %vm286, %v283, %v285
      %v291 = vmul.f32 %v277, %v283
      %v292 = vmul.f32 %v278, %v287
      %v293 = vmul.f32 %v279, %v285
      %297 = vrot.lane.b32.xlu0 %v291, 98
      %v298 = vpop.permute.xlu0 %297
      %299 = vrot.lane.b32.xlu0 %v292, 98
      %v300 = vpop.permute.xlu0 %299
      %301 = vrot.lane.b32.xlu0 %v293, 98
      %v302 = vpop.permute.xlu0 %301
      %vm303 = vcmask 801792
      %v304 = vsel %vm303, %v298, %v300
      %v305 = vsel %vm303, %v300, %v302
      %v309 = vadd.f32 %v270, %v304
      %v310 = vadd.f32 %v271, %v305
      %v311 = vadd.f32 %v272, %v302
      %vm312 = vcmp.ge.s32.totalorder %v268, 1
      %vm313 = vcmp.ge.s32.totalorder %v269, 1
      %v314 = vsel %vm312, 0.21052228, 0.0
      %v315 = vsel %vm313, 0.21052228, 0.0
      %318 = vrot.lane.b32.xlu0 %v314, 127
      %v319 = vpop.permute.xlu0 %318
      %320 = vrot.lane.b32.xlu0 %v315, 127
      %v321 = vpop.permute.xlu0 %320
      %vm322 = vcmask 1039360
      %v323 = vsel %vm322, %v319, %v321
      %v327 = vmul.f32 %v277, %v319
      %v328 = vmul.f32 %v278, %v323
      %v329 = vmul.f32 %v279, %v321
      %333 = vrot.lane.b32.xlu0 %v327, 97
      %v334 = vpop.permute.xlu0 %333
      %335 = vrot.lane.b32.xlu0 %v328, 97
      %v336 = vpop.permute.xlu0 %335
      %337 = vrot.lane.b32.xlu0 %v329, 97
      %v338 = vpop.permute.xlu0 %337
      %vm339 = vcmask 793600
      %v340 = vsel %vm339, %v334, %v336
      %v341 = vsel %vm339, %v336, %v338
      %v345 = vadd.f32 %v309, %v340
      %v346 = vadd.f32 %v310, %v341
      %v347 = vadd.f32 %v311, %v338
      %vm348 = vcmp.le.s32.totalorder %v268, 14
      %vm349 = vcmp.le.s32.totalorder %v269, 14
      %v350 = vsel %vm348, 0.21052228, 0.0
      %v351 = vsel %vm349, 0.21052228, 0.0
      %v352 = vld [vmem:[#allocation2 + $0x8] sm:$0xff]
      %v353 = vld [vmem:[#allocation2 + $0x10] sm:$0xff]
      %v354 = vld [vmem:[#allocation2 + $0x18] sm:$0xff]
      %357 = vrot.lane.b32.xlu0 %v350, 1
      %v358 = vpop.permute.xlu0 %357
      %359 = vrot.lane.b32.xlu0 %v351, 1
      %v360 = vpop.permute.xlu0 %359
      %vm361 = vcmask 7168
      %v362 = vsel %vm361, %v358, %v360
      %v366 = vmul.f32 %v352, %v358
      %v367 = vmul.f32 %v353, %v362
      %v368 = vmul.f32 %v354, %v360
      %372 = vrot.lane.b32.xlu0 %v366, 95
      %v373 = vpop.permute.xlu0 %372
      %374 = vrot.lane.b32.xlu0 %v367, 95
      %v375 = vpop.permute.xlu0 %374
      %376 = vrot.lane.b32.xlu0 %v368, 95
      %v377 = vpop.permute.xlu0 %376
      %vm378 = vcmask 777216
      %v379 = vsel %vm378, %v373, %v375
      %v380 = vsel %vm378, %v375, %v377
      %v384 = vadd.f32 %v345, %v373
      %v385 = vadd.f32 %v346, %v379
      %v386 = vadd.f32 %v347, %v380
      %vm387 = vcmp.le.s32.totalorder %v268, 13
      %vm388 = vcmp.le.s32.totalorder %v269, 13
      %v389 = vsel %vm387, 0.17820325, 0.0
      %v390 = vsel %vm388, 0.17820325, 0.0
      %393 = vrot.lane.b32.xlu0 %v389, 2
      %v394 = vpop.permute.xlu0 %393
      %395 = vrot.lane.b32.xlu0 %v390, 2
      %v396 = vpop.permute.xlu0 %395
      %vm397 = vcmask 15360
      %v398 = vsel %vm397, %v394, %v396
      %v402 = vmul.f32 %v352, %v394
      %v403 = vmul.f32 %v353, %v398
      %v404 = vmul.f32 %v354, %v396
      %408 = vrot.lane.b32.xlu0 %v402, 94
      %v409 = vpop.permute.xlu0 %408
      %410 = vrot.lane.b32.xlu0 %v403, 94
      %v411 = vpop.permute.xlu0 %410
      %412 = vrot.lane.b32.xlu0 %v404, 94
      %v413 = vpop.permute.xlu0 %412
      %vm414 = vcmask 769024
      %v415 = vsel %vm414, %v409, %v411
      %v416 = vsel %vm414, %v411, %v413
      %v420 = vadd.f32 %v384, %v409
      %v421 = vadd.f32 %v385, %v415
      %v422 = vadd.f32 %v386, %v416
      %v426 = vrot.slane %v420, 7
      %v427 = vrot.slane %v421, 7
      %v428 = vrot.slane %v422, 7
      %v432 = vsub.f32 %v420, %v426
      %v433 = vsub.f32 %v421, %v427
      %v434 = vsub.f32 %v422, %v428
      %v438 = vrot.slane %v432, 1
      %v439 = vrot.slane %v433, 1
      %v440 = vrot.slane %v434, 1
      %441 = vrot.lane.b32.xlu0 %v438, 32
      %v442 = vpop.permute.xlu0 %441
      %443 = vrot.lane.b32.xlu0 %v439, 32
      %v444 = vpop.permute.xlu0 %443
      %445 = vrot.lane.b32.xlu0 %v440, 32
      %v446 = vpop.permute.xlu0 %445
      %v447 = vsel %vm258, %v442, %v444
      %v448 = vsel %vm258, %v444, %v446
      %451 = vst [vmem:[%s150] sm:$0x7f] %v447
      %452 = vst [vmem:[%s150 + $0x8] sm:$0x7f] %v448
      %vm453 = vcmask 1048321
      %v454 = vsel %vm453, %v432, inf
      %vm455 = vcmask 1047553
      %v456 = vsel %vm455, %v433, inf
      %vm457 = vcmask 785409
      %v458 = vsel %vm457, %v434, inf
      %v459 = vmin.f32 %v454, %v456
      %v460 = vmin.f32 %v459, %v458
      %461 = vmin.xlane.f32.xlu0 %v460
      %v462 = vpop.xlane.xlu0 %461
      %v463 = vrot.slane %v462, 4
      %v464 = vmin.f32 %v462, %v463
      %v465 = vrot.slane %v464, 2
      %v466 = vmin.f32 %v464, %v465
      %v467 = vrot.slane %v466, 1
      %v468 = vmin.f32 %v466, %v467
      %s469 = vtos %v468
      %v470 = vstv %s469
      %471 = vst [vmem:[%s154] sm:$0x1] %v470
      %v472 = vsel %vm453, %v432, -inf
      %v473 = vsel %vm455, %v433, -inf
      %v474 = vsel %vm457, %v434, -inf
      %v475 = vmax.f32 %v472, %v473
      %v476 = vmax.f32 %v475, %v474
      %477 = vmax.xlane.f32.xlu0 %v476
      %v478 = vpop.xlane.xlu0 %477
      %v479 = vrot.slane %v478, 4
      %v480 = vmax.f32 %v478, %v479
      %v481 = vrot.slane %v480, 2
      %v482 = vmax.f32 %v480, %v481
      %v483 = vrot.slane %v482, 1
      %v484 = vmax.f32 %v482, %v483
      %s485 = vtos %v484
      %v486 = vstv %s485
      %487 = vst [vmem:[%s154 + $0x1] sm:$0x1] %v486
      %p488 = scmp.lt.s32.totalorder %s14, 5
      %s489 = scalar_select %p488, %s14, 5
      %s490 = smul.addr %s489, 2
      %s491 = smul.addr %s490, 8
      %s492 = scalar_lea.vmem %s1, %s491
      %p493 = scmp.lt.s32.totalorder %s14, 5
      %s494 = scalar_select %p493, %s14, 5
      %s495 = smul.addr %s494, 2
      %s496 = scalar_lea.vmem %s2, %s495
      // Predicated region
      $region25: #{degrad_forward.2} parent=23 // pred_check
        %p497 = pneg %p58
      $region26: #{degrad_forward.2} parent=23 // pred_check_branch
        %499 = sbr.rel (%p497) target = $region28
      $region27: #{degrad_forward.2} parent=23 // pred_region
        _
      $region28: #{degrad_forward.2} parent=23 // pred_fallthru
        _
      // Predicated region
      $region29: #{degrad_forward.2} parent=23 // pred_check
        %p500 = pneg %p84
      $region30: #{degrad_forward.2} parent=23 // pred_check_branch
        %502 = sbr.rel (%p500) target = $region32
      $region31: #{degrad_forward.2} parent=23 // pred_region
        _
      $region32: #{degrad_forward.2} parent=23 // pred_fallthru
        _
    $region24: #{degrad_forward.2} parent=5 // pred_fallthru
      _
    %p503 = scmp.le.s32.totalorder 2, %s9
    // Predicated region
    $region33: #{degrad_forward.2} parent=5 // pred_check
      %p504 = pneg %p503
    $region34: #{degrad_forward.2} parent=5 // pred_check_branch
      %506 = sbr.rel (%p504) target = $region36
    $region35: #{degrad_forward.2} parent=5 // pred_region
      %s507 = ssub.s32 %s9, 2
      // Predicated region
      $region37: #{degrad_forward.2} parent=35 // pred_check
        %p508 = pneg %p64
      $region38: #{degrad_forward.2} parent=35 // pred_check_branch
        %510 = sbr.rel (%p508) target = $region40
      $region39: #{degrad_forward.2} parent=35 // pred_region
        %p511 = scmp.lt.s32.totalorder %s15, 5
        %s512 = scalar_select %p511, %s15, 5
        %s513 = smul.addr %s512, 2
        %s514 = smul.addr %s513, 8
        %s515 = scalar_lea.vmem %s1, %s514
      $region40: #{degrad_forward.2} parent=35 // pred_fallthru
        _
      // Predicated region
      $region41: #{degrad_forward.2} parent=35 // pred_check
        %p516 = pneg %p90
      $region42: #{degrad_forward.2} parent=35 // pred_check_branch
        %518 = sbr.rel (%p516) target = $region44
      $region43: #{degrad_forward.2} parent=35 // pred_region
        %p519 = scmp.lt.s32.totalorder %s15, 5
        %s520 = scalar_select %p519, %s15, 5
        %s521 = smul.addr %s520, 2
        %s522 = scalar_lea.vmem %s2, %s521
      $region44: #{degrad_forward.2} parent=35 // pred_fallthru
        _
    $region36: #{degrad_forward.2} parent=5 // pred_fallthru
      _
  $region6: #{degrad_forward.2} parent=0 // loop_footer
    %s13 = sadd.s32 1, %s9
  $region7: #{degrad_forward.2} parent=0 // loop_footer_branch
    %8 = sbr.rel target = $region3
  $region8: #{degrad_forward.2} parent=0 // loop_exit
    _

</llo_original>
